<compile_context>
chip_gen: v7x
topology: tpu7x:2x2x1
jax: 0.10.0
libtpu: 0.0.40
codegen_flags: <defaults>
</compile_context>

<pallas_src>
import jax
import jax.numpy as jnp
from jax.experimental import pallas as pl
from jax.experimental.pallas import tpu as pltpu


def classifier_kernel(x_ref, w_stem_ref, b_stem_ref, w1_ref, b1_ref,
                      w2_ref, b2_ref, out_ref, acc_ref):
    """One (batch, hw-tile) grid step.

    x_ref:      (1, C, HW_TILE)  bf16  input pixels, HW on the lane axis
    w_stem_ref: (F, C)           f32   stand-in 1x1-conv weight (normalize folded in)
    b_stem_ref: (F, 1)           f32   folded stem bias
    w1_ref:     (F, HIDDEN)      f32   fc[0] weight with the 1/HW pool scale folded in
    b1_ref:     (1, HIDDEN)      f32
    w2_ref:     (HIDDEN, NC_PAD) f32   fc[3] weight, zero-padded to a 128-lane width
    b2_ref:     (1, NC_PAD)      f32
    out_ref:    (1, 1, NC_PAD)   f32   logits row for this batch element
    acc_ref:    (F, HW_TILE)     f32   scratch: running sum of ReLU'd stem features
    """
    h_idx = pl.program_id(1)

    @pl.when(h_idx == 0)
    def _init():
        acc_ref[...] = jnp.zeros_like(acc_ref)

    # ---- stand-in backbone stem: normalization-folded 1x1 conv + ReLU ----
    x = x_ref[0].astype(jnp.float32)                      # (C, HW_TILE), f32 compute
    n_chan = x_ref.shape[1]                               # static, tiny (3)
    # C-term broadcast FMA on the VPU: (F,1) * (1,HW_TILE) -> (F, HW_TILE)
    feat = b_stem_ref[...] + w_stem_ref[:, 0:1] * x[0:1, :]
    for c in range(1, n_chan):                            # unrolled, static trip count
        feat = feat + w_stem_ref[:, c:c + 1] * x[c:c + 1, :]
    acc_ref[...] += jnp.maximum(feat, 0.0)                # ReLU + accumulate pool sum

    # ---- finalize: global average pool + fc head, once per batch element ----
    @pl.when(h_idx == pl.num_programs(1) - 1)
    def _finalize():
        pooled = jnp.sum(acc_ref[...], axis=1, keepdims=True)        # (F, 1) lane reduce
        # fc[0]: Linear(F, HIDDEN) as broadcast-mul + sublane reduce (K=F=32 is too
        # small for the MXU); the 1/HW mean scale is already folded into w1.
        hidden = jnp.sum(pooled * w1_ref[...], axis=0, keepdims=True) + b1_ref[...]
        hidden = jnp.maximum(hidden, 0.0)                             # ReLU
        # Dropout(p=0.2) is identity in eval mode.
        # fc[3]: Linear(HIDDEN, NC_PAD) -> lane-dense MXU matmul + lane-dense store.
        logits = jnp.dot(hidden, w2_ref[...],
                         preferred_element_type=jnp.float32) + b2_ref[...]
        out_ref[0] = logits                                           # (1, NC_PAD)


def _pick_hw_tile(hw, max_tile=2048):
    """Largest multiple of 128 that divides HW, capped at max_tile (VMEM-friendly
    on v7x's 64 MiB; v6e/v5e could go larger)."""
    if hw % 128 != 0:
        return hw                       # lane dim == full array dim is always legal
    t = min(hw, (max_tile // 128) * 128)
    while hw % t != 0:
        t -= 128
    return t


def prepare_kernel_params(params, input_size, lane_pad=128):
    """Fold normalization + pool scale into weights; pad classifier to 128 lanes."""
    mean = params['mean'].astype(jnp.float32)                    # (C,)
    std = params['std'].astype(jnp.float32)                      # (C,)
    w_stem = params['w_stem'].astype(jnp.float32)                # (C, F)
    b_stem = params['b_stem'].astype(jnp.float32)                # (F,)
    # ((x - mean)/std) @ W + b  ==  x @ (W/std[:,None]) + (b - (mean/std) @ W)
    w_stem_t = (w_stem / std[:, None]).T                         # (F, C), transposed
    b_stem_c = (b_stem - (mean / std) @ w_stem)[:, None]         # (F, 1)

    hw = input_size * input_size
    w1 = params['w1'].astype(jnp.float32) / hw                   # fold 1/HW mean pool
    b1 = params['b1'].astype(jnp.float32).reshape(1, -1)         # (1, HIDDEN)

    hidden, num_classes = params['w2'].shape
    nc_pad = ((num_classes + lane_pad - 1) // lane_pad) * lane_pad
    w2 = jnp.zeros((hidden, nc_pad), jnp.float32).at[:, :num_classes].set(
        params['w2'].astype(jnp.float32))
    b2 = jnp.zeros((1, nc_pad), jnp.float32).at[:, :num_classes].set(
        params['b2'].astype(jnp.float32).reshape(1, -1))
    return w_stem_t, b_stem_c, w1, b1, w2, b2, num_classes, nc_pad


def generic_classifier_forward(x_nchw, params, input_size, hw_tile=None):
    """JAX glue (NEAREST resize, dtype narrowing, weight folding) + one fused
    tiled Pallas call."""
    B, C, H, W = x_nchw.shape
    hw = input_size * input_size

    # T.Resize(input_size, interpolation=NEAREST) for square outputs.
    # torch 'nearest' picks src = floor(dst * in / out), matched here.
    x = x_nchw
    if (H, W) != (input_size, input_size):
        ri = (jnp.arange(input_size) * H) // input_size
        ci = (jnp.arange(input_size) * W) // input_size
        x = x[:, :, ri[:, None], ci[None, :]]

    # Keep NCHW; flatten spatial onto the lane axis (HW last). DMA a narrow
    # storage dtype (bf16 is exact for uint8 pixel data); compute in f32 inside.
    x = x.reshape(B, C, hw)
    if x.dtype != jnp.bfloat16:
        x = x.astype(jnp.bfloat16)

    (w_stem_t, b_stem_c, w1, b1, w2, b2,
     num_classes, nc_pad) = prepare_kernel_params(params, input_size)
    feat_dim, _hidden = w1.shape

    if hw_tile is None:
        hw_tile = _pick_hw_tile(hw)
    assert hw % hw_tile == 0

    full = lambda a: pl.BlockSpec(a.shape, lambda b, h: (0,) * a.ndim)

    out = pl.pallas_call(
        classifier_kernel,
        out_shape=jax.ShapeDtypeStruct((B, 1, nc_pad), jnp.float32),
        grid_spec=pltpu.PrefetchScalarGridSpec(
            num_scalar_prefetch=0,
            grid=(B, hw // hw_tile),
            in_specs=[
                pl.BlockSpec((1, C, hw_tile), lambda b, h: (b, 0, h)),
                full(w_stem_t), full(b_stem_c),
                full(w1), full(b1), full(w2), full(b2),
            ],
            out_specs=pl.BlockSpec((1, 1, nc_pad), lambda b, h: (b, 0, 0)),
            scratch_shapes=[pltpu.VMEM((feat_dim, hw_tile), jnp.float32)],
        ),
        compiler_params=pltpu.CompilerParams(
            # batch axis parallel (v7x megacore); HW axis carries the pool reduction
            dimension_semantics=("parallel", "arbitrary"),
            vmem_limit_bytes=48 * 1024 * 1024,
        ),
    )(x, w_stem_t, b_stem_c, w1, b1, w2, b2)

    return out.reshape(B, nc_pad)[:, :num_classes]


def make_params(key, channels, feat_dim, hidden, num_classes, mean, std):
    """Parameters in natural (PyTorch-style) layouts; folding happens later."""
    ks = jax.random.split(key, 6)
    return {
        'mean': jnp.asarray(mean, jnp.float32),
        'std': jnp.asarray(std, jnp.float32),
        'w_stem': 0.1 * jax.random.normal(ks[0], (channels, feat_dim), jnp.float32),
        'b_stem': 0.01 * jax.random.normal(ks[1], (feat_dim,), jnp.float32),
        'w1': 0.1 * jax.random.normal(ks[2], (feat_dim, hidden), jnp.float32),
        'b1': 0.01 * jax.random.normal(ks[3], (hidden,), jnp.float32),
        'w2': 0.1 * jax.random.normal(ks[4], (hidden, num_classes), jnp.float32),
        'b2': 0.01 * jax.random.normal(ks[5], (num_classes,), jnp.float32),
    }


def reference_forward(x_nchw, params, input_size):
    """Pure-JAX reference (un-folded weights, explicit normalize + mean pool)."""
    B, C, H, W = x_nchw.shape
    x = x_nchw
    if (H, W) != (input_size, input_size):
        ri = (jnp.arange(input_size) * H) // input_size
        ci = (jnp.arange(input_size) * W) // input_size
        x = x[:, :, ri[:, None], ci[None, :]]
    x = x.reshape(B, C, input_size * input_size).astype(jnp.float32)
    xn = (x - params['mean'].reshape(1, C, 1)) / params['std'].reshape(1, C, 1)
    f = jnp.einsum('bcp,cf->bpf', xn, params['w_stem'],
                   precision='highest') + params['b_stem']
    f = jnp.maximum(f, 0.0)
    feats = jnp.mean(f, axis=1)                                   # (B, F)
    h = jnp.maximum(jnp.dot(feats, params['w1'], precision='highest')
                    + params['b1'], 0.0)
    return jnp.dot(h, params['w2'], precision='highest') + params['b2']


if __name__ == "__main__":
    # Small shapes consistent with the module: batch=2, channels=3 (RGB),
    # raw spatial 20x20 (exercises the NEAREST resize), input_size=16,
    # stand-in backbone feature dim F=32, fc hidden=128, num_classes=5.
    label_to_class_map = {0: 'a', 1: 'b', 2: 'c', 3: 'd', 4: 'e'}
    num_classes = len(label_to_class_map)
    input_size = 16
    mean = [0.554, 0.469, 0.348]
    std = [0.203, 0.173, 0.144]

    key = jax.random.PRNGKey(0)
    kx, kp = jax.random.split(key)
    # uint8 image-like input (T.ToDtype(torch.float32) casts inside the model)
    x = jax.random.randint(kx, (2, 3, 20, 20), 0, 256, dtype=jnp.int32).astype(jnp.uint8)

    params = make_params(kp, channels=3, feat_dim=32, hidden=128,
                         num_classes=num_classes, mean=mean, std=std)

    # hw_tile=128 -> grid (B, 2): exercises the init/accumulate/finalize path.
    logits = generic_classifier_forward(x, params, input_size, hw_tile=128)
    logits = jax.block_until_ready(logits)

    ref = reference_forward(x, params, input_size)
    assert logits.shape == (2, num_classes)
    assert jnp.allclose(logits, ref, atol=5e-2, rtol=2e-3), "mismatch vs reference"

    print("KERNEL_OK")
</pallas_src>

<mosaic_0001>
module attributes {stable_mosaic.version = 11 : i64} {
  func.func @classifier_kernel(%arg0: i32, %arg1: i32, %arg2: memref<1x3x128xbf16, #tpu.memory_space<vmem>>, %arg3: memref<32x3xf32, #tpu.memory_space<vmem>>, %arg4: memref<32x1xf32, #tpu.memory_space<vmem>>, %arg5: memref<32x128xf32, #tpu.memory_space<vmem>>, %arg6: memref<1x128xf32, #tpu.memory_space<vmem>>, %arg7: memref<128x128xf32, #tpu.memory_space<vmem>>, %arg8: memref<1x128xf32, #tpu.memory_space<vmem>>, %arg9: memref<1x1x128xf32, #tpu.memory_space<vmem>>, %arg10: memref<32x128xf32, #tpu.memory_space<vmem>>) attributes {dimension_semantics = [#tpu.dimension_semantics<parallel>, #tpu.dimension_semantics<arbitrary>], iteration_bounds = array<i64: 2, 2>, scalar_prefetch = 0 : i64, scratch_operands = 1 : i64, tpu.core_type = #tpu.core_type<tc>, window_params = [{transform_indices = @transform_0, window_bounds = array<i64: 1, 3, 128>}, {pipeline_mode = #tpu.pipeline_mode<synchronous>, transform_indices = @transform_1, window_bounds = array<i64: 32, 3>}, {pipeline_mode = #tpu.pipeline_mode<synchronous>, transform_indices = @transform_2, window_bounds = array<i64: 32, 1>}, {pipeline_mode = #tpu.pipeline_mode<synchronous>, transform_indices = @transform_3, window_bounds = array<i64: 32, 128>}, {pipeline_mode = #tpu.pipeline_mode<synchronous>, transform_indices = @transform_4, window_bounds = array<i64: 1, 128>}, {pipeline_mode = #tpu.pipeline_mode<synchronous>, transform_indices = @transform_5, window_bounds = array<i64: 128, 128>}, {pipeline_mode = #tpu.pipeline_mode<synchronous>, transform_indices = @transform_6, window_bounds = array<i64: 1, 128>}, {transform_indices = @transform_7, window_bounds = array<i64: 1, 1, 128>}]} {
    %c0_i32 = arith.constant 0 : i32
    %0 = arith.cmpi eq, %arg1, %c0_i32 : i32
    %1 = arith.extui %0 : i1 to i32
    %c0_i32_0 = arith.constant 0 : i32
    %2 = arith.cmpi ne, %1, %c0_i32_0 : i32
    scf.if %2 {
      %cst_14 = arith.constant 0.000000e+00 : f32
      %34 = vector.broadcast %cst_14 : f32 to vector<32x128xf32>
      %c0_15 = arith.constant 0 : index
      %c0_16 = arith.constant 0 : index
      %35 = vector.load %arg10[%c0_15, %c0_16] : memref<32x128xf32, #tpu.memory_space<vmem>>, vector<32x128xf32>
      tpu.vector_store %arg10[%c0_15, %c0_16], %34 {strides = array<i32>} : memref<32x128xf32, #tpu.memory_space<vmem>>, vector<32x128xf32>,
    } else {
    }
    %c0 = arith.constant 0 : index
    %c0_1 = arith.constant 0 : index
    %c0_2 = arith.constant 0 : index
    %3 = vector.load %arg2[%c0, %c0_1, %c0_2] : memref<1x3x128xbf16, #tpu.memory_space<vmem>>, vector<1x3x128xbf16>
    %4 = vector.shape_cast %3 : vector<1x3x128xbf16> to vector<3x128xbf16>
    %5 = arith.extf %4 : vector<3x128xbf16> to vector<3x128xf32>
    %c0_3 = arith.constant 0 : index
    %c0_4 = arith.constant 0 : index
    %6 = vector.load %arg4[%c0_3, %c0_4] : memref<32x1xf32, #tpu.memory_space<vmem>>, vector<32x1xf32>
    %c0_5 = arith.constant 0 : index
    %c0_6 = arith.constant 0 : index
    %7 = vector.load %arg3[%c0_5, %c0_6] : memref<32x3xf32, #tpu.memory_space<vmem>>, vector<32x1xf32>
    %8 = vector.extract_strided_slice %5 {offsets = [0, 0], sizes = [1, 128], strides = [1, 1]} : vector<3x128xf32> to vector<1x128xf32>
    %9 = vector.broadcast %7 : vector<32x1xf32> to vector<32x128xf32>
    %10 = vector.broadcast %8 : vector<1x128xf32> to vector<32x128xf32>
    %11 = arith.mulf %9, %10 : vector<32x128xf32>
    %12 = vector.broadcast %6 : vector<32x1xf32> to vector<32x128xf32>
    %13 = arith.addf %12, %11 : vector<32x128xf32>
    %c0_7 = arith.constant 0 : index
    %c1 = arith.constant 1 : index
    %14 = vector.load %arg3[%c0_7, %c1] : memref<32x3xf32, #tpu.memory_space<vmem>>, vector<32x1xf32>
    %15 = vector.extract_strided_slice %5 {offsets = [1, 0], sizes = [1, 128], strides = [1, 1]} : vector<3x128xf32> to vector<1x128xf32>
    %16 = vector.broadcast %14 : vector<32x1xf32> to vector<32x128xf32>
    %17 = vector.broadcast %15 : vector<1x128xf32> to vector<32x128xf32>
    %18 = arith.mulf %16, %17 : vector<32x128xf32>
    %19 = arith.addf %13, %18 : vector<32x128xf32>
    %c0_8 = arith.constant 0 : index
    %c2 = arith.constant 2 : index
    %20 = vector.load %arg3[%c0_8, %c2] : memref<32x3xf32, #tpu.memory_space<vmem>>, vector<32x1xf32>
    %21 = vector.extract_strided_slice %5 {offsets = [2, 0], sizes = [1, 128], strides = [1, 1]} : vector<3x128xf32> to vector<1x128xf32>
    %22 = vector.broadcast %20 : vector<32x1xf32> to vector<32x128xf32>
    %23 = vector.broadcast %21 : vector<1x128xf32> to vector<32x128xf32>
    %24 = arith.mulf %22, %23 : vector<32x128xf32>
    %25 = arith.addf %19, %24 : vector<32x128xf32>
    %c0_9 = arith.constant 0 : index
    %c0_10 = arith.constant 0 : index
    %26 = vector.load %arg10[%c0_9, %c0_10] : memref<32x128xf32, #tpu.memory_space<vmem>>, vector<32x128xf32>
    %cst = arith.constant 0.000000e+00 : f32
    %27 = vector.broadcast %cst : f32 to vector<32x128xf32>
    %28 = arith.maximumf %25, %27 : vector<32x128xf32>
    %29 = arith.addf %26, %28 : vector<32x128xf32>
    %c0_11 = arith.constant 0 : index
    %c0_12 = arith.constant 0 : index
    %30 = vector.load %arg10[%c0_11, %c0_12] : memref<32x128xf32, #tpu.memory_space<vmem>>, vector<32x128xf32>
    tpu.vector_store %arg10[%c0_11, %c0_12], %29 {strides = array<i32>} : memref<32x128xf32, #tpu.memory_space<vmem>>, vector<32x128xf32>,
    %c1_i32 = arith.constant 1 : i32
    %31 = arith.cmpi eq, %arg1, %c1_i32 : i32
    %32 = arith.extui %31 : i1 to i32
    %c0_i32_13 = arith.constant 0 : i32
    %33 = arith.cmpi ne, %32, %c0_i32_13 : i32
    scf.if %33 {
      %c0_14 = arith.constant 0 : index
      %c0_15 = arith.constant 0 : index
      %34 = vector.load %arg10[%c0_14, %c0_15] : memref<32x128xf32, #tpu.memory_space<vmem>>, vector<32x128xf32>
      %cst_16 = arith.constant dense<0.000000e+00> : vector<32xf32>
      %35 = vector.multi_reduction <add>, %34, %cst_16 [1] : vector<32x128xf32> to vector<32xf32>
      %36 = vector.shape_cast %35 : vector<32xf32> to vector<32x1xf32>
      %c0_17 = arith.constant 0 : index
      %c0_18 = arith.constant 0 : index
      %37 = vector.load %arg5[%c0_17, %c0_18] : memref<32x128xf32, #tpu.memory_space<vmem>>, vector<32x128xf32>
      %38 = vector.broadcast %36 : vector<32x1xf32> to vector<32x128xf32>
      %39 = arith.mulf %38, %37 : vector<32x128xf32>
      %cst_19 = arith.constant dense<0.000000e+00> : vector<128xf32>
      %40 = vector.multi_reduction <add>, %39, %cst_19 [0] : vector<32x128xf32> to vector<128xf32>
      %41 = vector.shape_cast %40 : vector<128xf32> to vector<1x128xf32>
      %c0_20 = arith.constant 0 : index
      %c0_21 = arith.constant 0 : index
      %42 = vector.load %arg6[%c0_20, %c0_21] : memref<1x128xf32, #tpu.memory_space<vmem>>, vector<1x128xf32>
      %43 = arith.addf %41, %42 : vector<1x128xf32>
      %cst_22 = arith.constant 0.000000e+00 : f32
      %44 = vector.broadcast %cst_22 : f32 to vector<1x128xf32>
      %45 = arith.maximumf %43, %44 : vector<1x128xf32>
      %c0_23 = arith.constant 0 : index
      %c0_24 = arith.constant 0 : index
      %46 = vector.load %arg7[%c0_23, %c0_24] : memref<128x128xf32, #tpu.memory_space<vmem>>, vector<128x128xf32>
      %cst_25 = arith.constant dense<0.000000e+00> : vector<1x128xf32>
      %47 = tpu.matmul %45, %46, %cst_25 {dimension_numbers = #tpu.dot_dimension_numbers<[1], [0], [0], [1], [0, 0, 1, 1], [], []>} : vector<1x128xf32>, vector<128x128xf32>, vector<1x128xf32> -> vector<1x128xf32>
      %c0_26 = arith.constant 0 : index
      %c0_27 = arith.constant 0 : index
      %48 = vector.load %arg8[%c0_26, %c0_27] : memref<1x128xf32, #tpu.memory_space<vmem>>, vector<1x128xf32>
      %49 = arith.addf %47, %48 : vector<1x128xf32>
      %c0_28 = arith.constant 0 : index
      %c0_29 = arith.constant 0 : index
      %c0_30 = arith.constant 0 : index
      %50 = vector.load %arg9[%c0_28, %c0_29, %c0_30] : memref<1x1x128xf32, #tpu.memory_space<vmem>>, vector<1x1x128xf32>
      %51 = vector.shape_cast %50 : vector<1x1x128xf32> to vector<1x128xf32>
      %52 = vector.shape_cast %49 : vector<1x128xf32> to vector<1x1x128xf32>
      tpu.vector_store %arg9[%c0_28, %c0_29, %c0_30], %52 {strides = array<i32>} : memref<1x1x128xf32, #tpu.memory_space<vmem>>, vector<1x1x128xf32>,
    } else {
    }
    return
  }
  func.func @transform_0(%arg0: i32, %arg1: i32) -> (i32, i32, i32) {
    %c0_i32 = arith.constant 0 : i32
    %c0_i32_0 = arith.constant 0 : i32
    return %arg0, %c0_i32, %arg1 : i32, i32, i32
  }
  func.func @transform_1(%arg0: i32, %arg1: i32) -> (i32, i32) {
    %c0_i32 = arith.constant 0 : i32
    %c0_i32_0 = arith.constant 0 : i32
    %c0_i32_1 = arith.constant 0 : i32
    return %c0_i32, %c0_i32_0 : i32, i32
  }
  func.func @transform_2(%arg0: i32, %arg1: i32) -> (i32, i32) {
    %c0_i32 = arith.constant 0 : i32
    %c0_i32_0 = arith.constant 0 : i32
    %c0_i32_1 = arith.constant 0 : i32
    return %c0_i32, %c0_i32_0 : i32, i32
  }
  func.func @transform_3(%arg0: i32, %arg1: i32) -> (i32, i32) {
    %c0_i32 = arith.constant 0 : i32
    %c0_i32_0 = arith.constant 0 : i32
    %c0_i32_1 = arith.constant 0 : i32
    return %c0_i32, %c0_i32_0 : i32, i32
  }
  func.func @transform_4(%arg0: i32, %arg1: i32) -> (i32, i32) {
    %c0_i32 = arith.constant 0 : i32
    %c0_i32_0 = arith.constant 0 : i32
    %c0_i32_1 = arith.constant 0 : i32
    return %c0_i32, %c0_i32_0 : i32, i32
  }
  func.func @transform_5(%arg0: i32, %arg1: i32) -> (i32, i32) {
    %c0_i32 = arith.constant 0 : i32
    %c0_i32_0 = arith.constant 0 : i32
    %c0_i32_1 = arith.constant 0 : i32
    return %c0_i32, %c0_i32_0 : i32, i32
  }
  func.func @transform_6(%arg0: i32, %arg1: i32) -> (i32, i32) {
    %c0_i32 = arith.constant 0 : i32
    %c0_i32_0 = arith.constant 0 : i32
    %c0_i32_1 = arith.constant 0 : i32
    return %c0_i32, %c0_i32_0 : i32, i32
  }
  func.func @transform_7(%arg0: i32, %arg1: i32) -> (i32, i32, i32) {
    %c0_i32 = arith.constant 0 : i32
    %c0_i32_0 = arith.constant 0 : i32
    %c0_i32_1 = arith.constant 0 : i32
    return %arg0, %c0_i32, %c0_i32_0 : i32, i32, i32
  }
}

</mosaic_0001>

<llo_original>
// kernel: tpu_custom_call.1
$region0: #{tpu_custom_call.1}
  #allocation0 [shape = 'u32[]', space=smem, size = 0x4, offset = 0x4, fixed_abs, tag = 'smem constant byte address 0x4 - core index']
  #allocation1 [shape = 'u32[144,128]{1,0:T(1,128)}', space=vmem, size = 0x12000, scoped, tag = 'internal scratch']
  #allocation2 [shape = 'f32[32,128]{1,0:T(8,128)}', space=vmem, size = 0x4000, scoped, tag = 'scratch operand']
  %s0 = inlined_call_operand.vmem [shape: bf16[2,3,256], index: 0, kind: input, shape index: {}]
  %s1 = inlined_call_operand.vmem [shape: f32[32,3], index: 1, kind: input, shape index: {}]
  %s2 = inlined_call_operand.vmem [shape: f32[32,1], index: 2, kind: input, shape index: {}]
  %s3 = inlined_call_operand.vmem [shape: f32[32,128], index: 3, kind: input, shape index: {}]
  %s4 = inlined_call_operand.vmem [shape: f32[1,128], index: 4, kind: input, shape index: {}]
  %s5 = inlined_call_operand.hbm [shape: f32[128,128], index: 5, kind: input, shape index: {}]
  %s6 = inlined_call_operand.vmem [shape: f32[1,128], index: 6, kind: input, shape index: {}]
  %s7 = inlined_call_operand.hbm [shape: f32[2,1,128], index: 7, kind: output, shape index: {}]
  %s8 = sld [smem:[#allocation0]]
  $region73: #{tpu_custom_call.1} parent=0
    _
  %s10 = ssub.s32 1, %s8
  %s11 = scalar_select 0, %s10, %s8
  $region1: #{tpu_custom_call.1} parent=0
    #allocation3 [shape = 'u8[65536]{0}', space=vmem, size = 0x10000, scoped, tag = 'input window, operand 5, single buffered']
    #allocation4 [shape = 's32[2]{0}', space=sflag, size = 0x8, scoped, tag = 'scoped memory for tpu_custom_call.1']
    #allocation5 [shape = 's32[2]{0}', space=sflag, size = 0x8, scoped, tag = 'scoped memory for tpu_custom_call.1']
    #allocation6 [shape = 'u8[1024]{0}', space=vmem, size = 0x400, scoped, tag = 'output window, operand 0']
    %12 = vsyncpa [#allocation4], 0
    %13 = vsyncpa [#allocation5], 0
    %s14 = scalar_lea.sflag [#allocation5], 1
    %15 = vsyncpa %s14, 0
    loop: start=0, step=1, limit=6
    $region2: #{tpu_custom_call.1} parent=1 // loop_pre_header
      _
    $region3: #{tpu_custom_call.1} parent=1 // loop_header
      %s17 = sphi 0, %s21
      %p18 = scmp.ge.s32.totalorder %s17, 6
      %s24 = sphi 0, %s36
      %s25 = sphi 0, %s32
      %s26 = sphi 0, %s24
      %s27 = sphi 0, %s25
      %s28 = sphi 0, %s26
      %s29 = sphi 0, %s27
      %s41 = sphi 0, %s43
      %s44 = sphi 0, %s41
      %s45 = sphi 0, %s44
      %s61 = sphi 0, %s45
      %s65 = sphi 0, %s65
      %s67 = sphi 0, %s65
      %s68 = sphi 0, %s67
      %s82 = sphi 0, %s68
      %s86 = sphi 0, %s86
      %s88 = sphi 0, %s86
      %s89 = sphi 0, %s88
      %s103 = sphi 0, %s89
      %s107 = sphi 0, %s107
      %s109 = sphi 0, %s107
      %s110 = sphi 0, %s109
      %s124 = sphi 0, %s110
      %s128 = sphi 0, %s128
      %s130 = sphi 0, %s128
      %s131 = sphi 0, %s130
      %s145 = sphi 0, %s131
      %s149 = sphi 0, %s149
      %s151 = sphi 0, %s149
      %s152 = sphi 0, %s151
      %s166 = sphi 0, %s152
      %s170 = sphi 0, %s170
      %s172 = sphi 0, %s170
      %s173 = sphi 0, %s172
      %s187 = sphi 0, %s173
      %s193 = sphi 0, %s195
      %s196 = sphi 0, %s193
      %s197 = sphi 0, %s196
      %s213 = sphi 0, %s197
    $region4: #{tpu_custom_call.1} parent=1 // loop_header_branch
      %20 = sbr.rel (%p18) target = $region8
    $region5: #{tpu_custom_call.1} parent=1 // loop_body
      %s22 = ssub.s32 %s17, 1
      %s23 = ssub.s32 %s17, 2
      %s30 = sadd.s32 1, %s25
      %p31 = scmp.ge.s32.totalorder %s30, 2
      %s32 = scalar_select %p31, 0, %s30
      %s33 = sadd.s32 1, %s24
      %s34 = scalar_select %p31, %s33, %s24
      %p35 = scmp.ge.s32.totalorder %s34, 2
      %s36 = scalar_select %p35, 0, %s34
      %s37 = ssub.s32 %s24, %s36
      %s38 = ssub.s32 %s25, %s32
      %s39 = sor.u32 %s37, %s38
      %p40 = scmp.eq.s32.totalorder %s39, 0
      %s42 = sadd.s32 %s41, 1
      %s43 = scalar_select %p40, %s41, %s42
      %p46 = pneg %p40
      %p47 = scmp.eq.s32.totalorder %s17, 3
      %p48 = por %p46, %p47
      %p49 = scmp.ne.s32.totalorder %s41, %s44
      %p50 = scmp.eq.s32.totalorder %s17, 0
      %p51 = por %p49, %p50
      %p52 = scmp.ne.s32.totalorder %s41, %s44
      %p53 = scmp.eq.s32.totalorder %s22, 3
      %p54 = por %p52, %p53
      %p55 = scmp.ne.s32.totalorder %s44, %s45
      %p56 = scmp.eq.s32.totalorder %s22, 0
      %p57 = por %p55, %p56
      %p58 = scmp.ne.s32.totalorder %s44, %s45
      %p59 = scmp.eq.s32.totalorder %s23, 3
      %p60 = por %p58, %p59
      %p62 = scmp.ne.s32.totalorder %s45, %s61
      %p63 = scmp.eq.s32.totalorder %s23, 0
      %p64 = por %p62, %p63
      %s66 = sadd.s32 %s65, 1
      %p69 = scmp.eq.s32.totalorder %s17, 3
      %p70 = scmp.ne.s32.totalorder %s65, %s67
      %p71 = scmp.eq.s32.totalorder %s17, 0
      %p72 = por %p70, %p71
      %p73 = scmp.ne.s32.totalorder %s65, %s67
      %p74 = scmp.eq.s32.totalorder %s22, 3
      %p75 = por %p73, %p74
      %p76 = scmp.ne.s32.totalorder %s67, %s68
      %p77 = scmp.eq.s32.totalorder %s22, 0
      %p78 = por %p76, %p77
      %p79 = scmp.ne.s32.totalorder %s67, %s68
      %p80 = scmp.eq.s32.totalorder %s23, 3
      %p81 = por %p79, %p80
      %p83 = scmp.ne.s32.totalorder %s68, %s82
      %p84 = scmp.eq.s32.totalorder %s23, 0
      %p85 = por %p83, %p84
      %s87 = sadd.s32 %s86, 1
      %p90 = scmp.eq.s32.totalorder %s17, 3
      %p91 = scmp.ne.s32.totalorder %s86, %s88
      %p92 = scmp.eq.s32.totalorder %s17, 0
      %p93 = por %p91, %p92
      %p94 = scmp.ne.s32.totalorder %s86, %s88
      %p95 = scmp.eq.s32.totalorder %s22, 3
      %p96 = por %p94, %p95
      %p97 = scmp.ne.s32.totalorder %s88, %s89
      %p98 = scmp.eq.s32.totalorder %s22, 0
      %p99 = por %p97, %p98
      %p100 = scmp.ne.s32.totalorder %s88, %s89
      %p101 = scmp.eq.s32.totalorder %s23, 3
      %p102 = por %p100, %p101
      %p104 = scmp.ne.s32.totalorder %s89, %s103
      %p105 = scmp.eq.s32.totalorder %s23, 0
      %p106 = por %p104, %p105
      %s108 = sadd.s32 %s107, 1
      %p111 = scmp.eq.s32.totalorder %s17, 3
      %p112 = scmp.ne.s32.totalorder %s107, %s109
      %p113 = scmp.eq.s32.totalorder %s17, 0
      %p114 = por %p112, %p113
      %p115 = scmp.ne.s32.totalorder %s107, %s109
      %p116 = scmp.eq.s32.totalorder %s22, 3
      %p117 = por %p115, %p116
      %p118 = scmp.ne.s32.totalorder %s109, %s110
      %p119 = scmp.eq.s32.totalorder %s22, 0
      %p120 = por %p118, %p119
      %p121 = scmp.ne.s32.totalorder %s109, %s110
      %p122 = scmp.eq.s32.totalorder %s23, 3
      %p123 = por %p121, %p122
      %p125 = scmp.ne.s32.totalorder %s110, %s124
      %p126 = scmp.eq.s32.totalorder %s23, 0
      %p127 = por %p125, %p126
      %s129 = sadd.s32 %s128, 1
      %p132 = scmp.eq.s32.totalorder %s17, 3
      %p133 = scmp.ne.s32.totalorder %s128, %s130
      %p134 = scmp.eq.s32.totalorder %s17, 0
      %p135 = por %p133, %p134
      %p136 = scmp.ne.s32.totalorder %s128, %s130
      %p137 = scmp.eq.s32.totalorder %s22, 3
      %p138 = por %p136, %p137
      %p139 = scmp.ne.s32.totalorder %s130, %s131
      %p140 = scmp.eq.s32.totalorder %s22, 0
      %p141 = por %p139, %p140
      %p142 = scmp.ne.s32.totalorder %s130, %s131
      %p143 = scmp.eq.s32.totalorder %s23, 3
      %p144 = por %p142, %p143
      %p146 = scmp.ne.s32.totalorder %s131, %s145
      %p147 = scmp.eq.s32.totalorder %s23, 0
      %p148 = por %p146, %p147
      %s150 = sadd.s32 %s149, 1
      %p153 = scmp.eq.s32.totalorder %s17, 3
      %p154 = scmp.ne.s32.totalorder %s149, %s151
      %p155 = scmp.eq.s32.totalorder %s17, 0
      %p156 = por %p154, %p155
      %p157 = scmp.ne.s32.totalorder %s149, %s151
      %p158 = scmp.eq.s32.totalorder %s22, 3
      %p159 = por %p157, %p158
      %p160 = scmp.ne.s32.totalorder %s151, %s152
      %p161 = scmp.eq.s32.totalorder %s22, 0
      %p162 = por %p160, %p161
      %p163 = scmp.ne.s32.totalorder %s151, %s152
      %p164 = scmp.eq.s32.totalorder %s23, 3
      %p165 = por %p163, %p164
      %p167 = scmp.ne.s32.totalorder %s152, %s166
      %p168 = scmp.eq.s32.totalorder %s23, 0
      %p169 = por %p167, %p168
      %s171 = sadd.s32 %s170, 1
      %p174 = scmp.eq.s32.totalorder %s17, 3
      %p175 = scmp.ne.s32.totalorder %s170, %s172
      %p176 = scmp.eq.s32.totalorder %s17, 0
      %p177 = por %p175, %p176
      %p178 = scmp.ne.s32.totalorder %s170, %s172
      %p179 = scmp.eq.s32.totalorder %s22, 3
      %p180 = por %p178, %p179
      %p181 = scmp.ne.s32.totalorder %s172, %s173
      %p182 = scmp.eq.s32.totalorder %s22, 0
      %p183 = por %p181, %p182
      %p184 = scmp.ne.s32.totalorder %s172, %s173
      %p185 = scmp.eq.s32.totalorder %s23, 3
      %p186 = por %p184, %p185
      %p188 = scmp.ne.s32.totalorder %s173, %s187
      %p189 = scmp.eq.s32.totalorder %s23, 0
      %p190 = por %p188, %p189
      %s191 = ssub.s32 %s24, %s36
      %p192 = scmp.eq.s32.totalorder %s191, 0
      %s194 = sadd.s32 %s193, 1
      %s195 = scalar_select %p192, %s193, %s194
      %p198 = pneg %p192
      %p199 = scmp.eq.s32.totalorder %s17, 3
      %p200 = por %p198, %p199
      %p201 = scmp.ne.s32.totalorder %s193, %s196
      %p202 = scmp.eq.s32.totalorder %s17, 0
      %p203 = por %p201, %p202
      %p204 = scmp.ne.s32.totalorder %s193, %s196
      %p205 = scmp.eq.s32.totalorder %s22, 3
      %p206 = por %p204, %p205
      %p207 = scmp.ne.s32.totalorder %s196, %s197
      %p208 = scmp.eq.s32.totalorder %s22, 0
      %p209 = por %p207, %p208
      %p210 = scmp.ne.s32.totalorder %s196, %s197
      %p211 = scmp.eq.s32.totalorder %s23, 3
      %p212 = por %p210, %p211
      %p214 = scmp.ne.s32.totalorder %s197, %s213
      %p215 = scmp.eq.s32.totalorder %s23, 0
      %p216 = por %p214, %p215
      %p217 = scmp.le.s32.totalorder 1, %s17
      %p218 = scmp.lt.s32.totalorder %s17, 5
      %p219 = pnand %p217, %p218
      %p220 = pneg %p219
      // Predicated region
      $region9: #{tpu_custom_call.1} parent=5 // pred_check
        _
      $region10: #{tpu_custom_call.1} parent=5 // pred_check_branch
        %222 = sbr.rel (%p219) target = $region12
      $region11: #{tpu_custom_call.1} parent=5 // pred_region
        %s223 = ssub.s32 %s17, 1
        // Predicated region
        $region13: #{tpu_custom_call.1} parent=11 // pred_check
          %p224 = pneg %p78
        $region14: #{tpu_custom_call.1} parent=11 // pred_check_branch
          %226 = sbr.rel (%p224) target = $region16
        $region15: #{tpu_custom_call.1} parent=11 // pred_region
          _
        $region16: #{tpu_custom_call.1} parent=11 // pred_fallthru
          _
        // Predicated region
        $region17: #{tpu_custom_call.1} parent=11 // pred_check
          %p227 = pneg %p99
        $region18: #{tpu_custom_call.1} parent=11 // pred_check_branch
          %229 = sbr.rel (%p227) target = $region20
        $region19: #{tpu_custom_call.1} parent=11 // pred_region
          _
        $region20: #{tpu_custom_call.1} parent=11 // pred_fallthru
          _
        // Predicated region
        $region21: #{tpu_custom_call.1} parent=11 // pred_check
          %p230 = pneg %p120
        $region22: #{tpu_custom_call.1} parent=11 // pred_check_branch
          %232 = sbr.rel (%p230) target = $region24
        $region23: #{tpu_custom_call.1} parent=11 // pred_region
          _
        $region24: #{tpu_custom_call.1} parent=11 // pred_fallthru
          _
        // Predicated region
        $region25: #{tpu_custom_call.1} parent=11 // pred_check
          %p233 = pneg %p141
        $region26: #{tpu_custom_call.1} parent=11 // pred_check_branch
          %235 = sbr.rel (%p233) target = $region28
        $region27: #{tpu_custom_call.1} parent=11 // pred_region
          _
        $region28: #{tpu_custom_call.1} parent=11 // pred_fallthru
          _
        // Predicated region
        $region29: #{tpu_custom_call.1} parent=11 // pred_check
          %p236 = pneg %p162
        $region30: #{tpu_custom_call.1} parent=11 // pred_check_branch
          %238 = sbr.rel (%p236) target = $region32
        $region31: #{tpu_custom_call.1} parent=11 // pred_region
          %s240 = ssub.s32 2048, 2048
          %241 = vsyncadd [#allocation4], %s240
          %s242 = sshll.u32 [#allocation3], 4
          %s243 = int_to_ptr.vmem [resolvable:$true] %s242
          %248 = dma.hbm_to_vmem [thread:$0]  %s5, 2048, %s243, [#allocation4], 128, 128, 8
        $region32: #{tpu_custom_call.1} parent=11 // pred_fallthru
          _
        // Predicated region
        $region33: #{tpu_custom_call.1} parent=11 // pred_check
          %p249 = pneg %p183
        $region34: #{tpu_custom_call.1} parent=11 // pred_check_branch
          %251 = sbr.rel (%p249) target = $region36
        $region35: #{tpu_custom_call.1} parent=11 // pred_region
          _
        $region36: #{tpu_custom_call.1} parent=11 // pred_fallthru
          _
      $region12: #{tpu_custom_call.1} parent=5 // pred_fallthru
        _
      %p252 = scmp.lt.s32.totalorder %s17, 4
      // Predicated region
      $region37: #{tpu_custom_call.1} parent=5 // pred_check
        %p253 = pneg %p252
      $region38: #{tpu_custom_call.1} parent=5 // pred_check_branch
        %255 = sbr.rel (%p253) target = $region40
      $region39: #{tpu_custom_call.1} parent=5 // pred_region
        // Predicated region
        $region41: #{tpu_custom_call.1} parent=39 // pred_check
          %p256 = pneg %p51
        $region42: #{tpu_custom_call.1} parent=39 // pred_check_branch
          %258 = sbr.rel (%p256) target = $region44
        $region43: #{tpu_custom_call.1} parent=39 // pred_region
          %p259 = scmp.lt.s32.totalorder %s24, 1
          %s260 = scalar_select %p259, %s24, 1
          %p261 = scmp.lt.s32.totalorder %s25, 1
          %s262 = scalar_select %p261, %s25, 1
          %s263 = smul.addr %s260, 2
          %s264 = sadd.s32 %s262, %s263
          %s265 = smul.addr %s264, 2
          %s266 = scalar_lea.vmem %s0, %s265
        $region44: #{tpu_custom_call.1} parent=39 // pred_fallthru
          _
      $region40: #{tpu_custom_call.1} parent=5 // pred_fallthru
        _
      %p267 = scmp.le.s32.totalorder 1, %s17
      %p268 = scmp.lt.s32.totalorder %s17, 5
      %p269 = pnand %p267, %p268
      %p270 = pneg %p269
      // Predicated region
      $region45: #{tpu_custom_call.1} parent=5 // pred_check
        _
      $region46: #{tpu_custom_call.1} parent=5 // pred_check_branch
        %272 = sbr.rel (%p269) target = $region48
      $region47: #{tpu_custom_call.1} parent=5 // pred_region
        %s273 = ssub.s32 %s17, 1
        // Predicated region
        $region49: #{tpu_custom_call.1} parent=47 // pred_check
          %p274 = pneg %p162
        $region50: #{tpu_custom_call.1} parent=47 // pred_check_branch
          %276 = sbr.rel (%p274) target = $region52
        $region51: #{tpu_custom_call.1} parent=47 // pred_region
          %277 = dma.done [#allocation4], 2048
        $region52: #{tpu_custom_call.1} parent=47 // pred_fallthru
          _
        %p278 = scmp.lt.s32.totalorder %s26, 1
        %s279 = scalar_select %p278, %s26, 1
        %p280 = scmp.lt.s32.totalorder %s27, 1
        %s281 = scalar_select %p280, %s27, 1
        %s282 = smul.addr %s279, 2
        %s283 = sadd.s32 %s281, %s282
        %s284 = smul.addr %s283, 2
        %s285 = scalar_lea.vmem %s0, %s284
        %p286 = pneg %p57
        %p287 = pneg %p54
        %p288 = pneg %p78
        %p289 = pneg %p75
        %p290 = pneg %p99
        %p291 = pneg %p96
        %p292 = pneg %p120
        %p293 = pneg %p117
        %p294 = pneg %p141
        %p295 = pneg %p138
        %p296 = pneg %p162
        %p297 = pneg %p159
        %p298 = pneg %p183
        %p299 = pneg %p180
        %p300 = pneg %p209
        %p301 = pneg %p206
        %s302 = sand.u32 %s196, 1
        %s303 = scalar_lea.sflag [#allocation5], %s302
        %s304 = sand.u32 %s196, 1
        %s305 = scalar_lea.vmem [#allocation6], %s304
        %p306 = scmp.lt.s32.totalorder %s26, 1
        %s307 = scalar_select %p306, %s26, 1
        %p308 = scmp.lt.s32.totalorder %s27, 1
        %s309 = scalar_select %p308, %s27, 1
        %s310 = smul.addr %s307, 2
        %s311 = sadd.s32 %s309, %s310
        %s312 = smul.addr %s311, 2
        %s313 = scalar_lea.vmem %s0, %s312
        %p314 = scmp.eq.s32.totalorder %s27, 0
        // Predicated region
        $region53: #{tpu_custom_call.1} parent=47 // pred_check
          %p315 = pneg %p314
        $region54: #{tpu_custom_call.1} parent=47 // pred_check_branch
          %317 = sbr.rel (%p315) target = $region56
        $region55: #{tpu_custom_call.1} parent=47 // pred_region
          %318 = vst [vmem:[#allocation2] sm:$0xff] 0.0
          %319 = vst [vmem:[#allocation2 + $0x8] sm:$0xff] 0.0
          %320 = vst [vmem:[#allocation2 + $0x10] sm:$0xff] 0.0
          %321 = vst [vmem:[#allocation2 + $0x18] sm:$0xff] 0.0
        $region56: #{tpu_custom_call.1} parent=47 // pred_fallthru
          _
        %v322 = vld [vmem:[%s313] sm:$0x3]
        %v323 = vunpack.c.l.bf16 %v322
        %v324 = vld [vmem:[%s2] sm:$0xff]
        %v325 = vld [vmem:[%s2 + $0x8] sm:$0xff]
        %v326 = vld [vmem:[%s2 + $0x10] sm:$0xff]
        %v327 = vld [vmem:[%s2 + $0x18] sm:$0xff]
        %v328 = vld [vmem:[%s1] sm:$0xff]
        %v329 = vld [vmem:[%s1 + $0x8] sm:$0xff]
        %v330 = vld [vmem:[%s1 + $0x10] sm:$0xff]
        %v331 = vld [vmem:[%s1 + $0x18] sm:$0xff]
        %333 = vset.pattern.permute.xlu0 0
        %334 = vperm.xlu0 %333, %v328
        %v335 = vpop.permute.xlu0 %334
        %338 = vset.pattern.permute.xlu0 0
        %339 = vperm.xlu0 %338, %v329
        %v340 = vpop.permute.xlu0 %339
        %343 = vset.pattern.permute.xlu0 0
        %344 = vperm.xlu0 %343, %v330
        %v345 = vpop.permute.xlu0 %344
        %348 = vset.pattern.permute.xlu0 0
        %349 = vperm.xlu0 %348, %v331
        %v350 = vpop.permute.xlu0 %349
        %v352 = vlaneseq
        %v353 = vshrl.u32 %v352, 7
        %v354 = vsub.s32 0, %v353
        %v355 = vrot.slane %v323, %v354
        %v356 = vmul.f32 %v335, %v355
        %v357 = vmul.f32 %v340, %v355
        %v358 = vmul.f32 %v345, %v355
        %v359 = vmul.f32 %v350, %v355
        %361 = vset.pattern.permute.xlu0 0
        %362 = vperm.xlu0 %361, %v324
        %v363 = vpop.permute.xlu0 %362
        %366 = vset.pattern.permute.xlu0 0
        %367 = vperm.xlu0 %366, %v325
        %v368 = vpop.permute.xlu0 %367
        %371 = vset.pattern.permute.xlu0 0
        %372 = vperm.xlu0 %371, %v326
        %v373 = vpop.permute.xlu0 %372
        %376 = vset.pattern.permute.xlu0 0
        %377 = vperm.xlu0 %376, %v327
        %v378 = vpop.permute.xlu0 %377
        %v380 = vadd.f32 %v363, %v356
        %v381 = vadd.f32 %v368, %v357
        %v382 = vadd.f32 %v373, %v358
        %v383 = vadd.f32 %v378, %v359
        %384 = vset.pattern.permute.xlu0 1
        %385 = vperm.xlu0 %384, %v328
        %v386 = vpop.permute.xlu0 %385
        %388 = vset.pattern.permute.xlu0 1
        %389 = vperm.xlu0 %388, %v329
        %v390 = vpop.permute.xlu0 %389
        %392 = vset.pattern.permute.xlu0 1
        %393 = vperm.xlu0 %392, %v330
        %v394 = vpop.permute.xlu0 %393
        %396 = vset.pattern.permute.xlu0 1
        %397 = vperm.xlu0 %396, %v331
        %v398 = vpop.permute.xlu0 %397
        %v400 = vlaneseq
        %v401 = vshrl.u32 %v400, 7
        %v402 = vsub.s32 1, %v401
        %v403 = vrot.slane %v323, %v402
        %v404 = vmul.f32 %v386, %v403
        %v405 = vmul.f32 %v390, %v403
        %v406 = vmul.f32 %v394, %v403
        %v407 = vmul.f32 %v398, %v403
        %v408 = vadd.f32 %v380, %v404
        %v409 = vadd.f32 %v381, %v405
        %v410 = vadd.f32 %v382, %v406
        %v411 = vadd.f32 %v383, %v407
        %412 = vset.pattern.permute.xlu0 2
        %413 = vperm.xlu0 %412, %v328
        %v414 = vpop.permute.xlu0 %413
        %416 = vset.pattern.permute.xlu0 2
        %417 = vperm.xlu0 %416, %v329
        %v418 = vpop.permute.xlu0 %417
        %420 = vset.pattern.permute.xlu0 2
        %421 = vperm.xlu0 %420, %v330
        %v422 = vpop.permute.xlu0 %421
        %424 = vset.pattern.permute.xlu0 2
        %425 = vperm.xlu0 %424, %v331
        %v426 = vpop.permute.xlu0 %425
        %v428 = vlaneseq
        %v429 = vshrl.u32 %v428, 7
        %v430 = vsub.s32 2, %v429
        %v431 = vrot.slane %v323, %v430
        %v432 = vmul.f32 %v414, %v431
        %v433 = vmul.f32 %v418, %v431
        %v434 = vmul.f32 %v422, %v431
        %v435 = vmul.f32 %v426, %v431
        %v436 = vadd.f32 %v408, %v432
        %v437 = vadd.f32 %v409, %v433
        %v438 = vadd.f32 %v410, %v434
        %v439 = vadd.f32 %v411, %v435
        %v440 = vld [vmem:[#allocation2] sm:$0xff]
        %v441 = vld [vmem:[#allocation2 + $0x8] sm:$0xff]
        %v442 = vld [vmem:[#allocation2 + $0x10] sm:$0xff]
        %v443 = vld [vmem:[#allocation2 + $0x18] sm:$0xff]
        %v444 = vmax.f32 %v436, 0.0
        %v445 = vmax.f32 %v437, 0.0
        %v446 = vmax.f32 %v438, 0.0
        %v447 = vmax.f32 %v439, 0.0
        %v448 = vadd.f32 %v440, %v444
        %v449 = vadd.f32 %v441, %v445
        %v450 = vadd.f32 %v442, %v446
        %v451 = vadd.f32 %v443, %v447
        %452 = vst [vmem:[#allocation2] sm:$0xff] %v448
        %453 = vst [vmem:[#allocation2 + $0x8] sm:$0xff] %v449
        %454 = vst [vmem:[#allocation2 + $0x10] sm:$0xff] %v450
        %455 = vst [vmem:[#allocation2 + $0x18] sm:$0xff] %v451
        %p456 = scmp.eq.s32.totalorder %s27, 1
        // Predicated region
        $region57: #{tpu_custom_call.1} parent=47 // pred_check
          %p457 = pneg %p456
        $region58: #{tpu_custom_call.1} parent=47 // pred_check_branch
          %459 = sbr.rel (%p457) target = $region60
        $region59: #{tpu_custom_call.1} parent=47 // pred_region
          %v460 = vld [vmem:[#allocation2] sm:$0xff]
          %v461 = vld [vmem:[#allocation2 + $0x8] sm:$0xff]
          %v462 = vld [vmem:[#allocation2 + $0x10] sm:$0xff]
          %v463 = vld [vmem:[#allocation2 + $0x18] sm:$0xff]
          %464 = vadd.xlane.f32.xlu0 %v460
          %v465 = vpop.xlane.xlu0 %464
          %466 = vadd.xlane.f32.xlu0 %v461
          %v467 = vpop.xlane.xlu0 %466
          %468 = vadd.xlane.f32.xlu0 %v462
          %v469 = vpop.xlane.xlu0 %468
          %470 = vadd.xlane.f32.xlu0 %v463
          %v471 = vpop.xlane.xlu0 %470
          %v472 = vld [vmem:[%s3] sm:$0xff]
          %v473 = vld [vmem:[%s3 + $0x8] sm:$0xff]
          %v474 = vld [vmem:[%s3 + $0x10] sm:$0xff]
          %v475 = vld [vmem:[%s3 + $0x18] sm:$0xff]
          %v476 = vmul.f32 %v465, %v472
          %v477 = vmul.f32 %v467, %v473
          %v478 = vmul.f32 %v469, %v474
          %v479 = vmul.f32 %v471, %v475
          %v480 = vadd.f32 %v476, %v477
          %v481 = vadd.f32 %v480, %v478
          %v482 = vadd.f32 %v481, %v479
          %v483 = vrot.slane %v482, 4
          %v484 = vadd.f32 %v482, %v483
          %v485 = vrot.slane %v484, 2
          %v486 = vadd.f32 %v484, %v485
          %v487 = vrot.slane %v486, 1
          %v488 = vadd.f32 %v486, %v487
          %v489 = vld [vmem:[%s4] sm:$0x1]
          %v490 = vadd.f32 %v488, %v489
          %v491 = vmax.f32 %v490, 0.0
          %v492 = vld [vmem:[#allocation3] sm:$0xff]
          %v493 = vld [vmem:[#allocation3 + $0x8] sm:$0xff]
          %v494 = vld [vmem:[#allocation3 + $0x10] sm:$0xff]
          %v495 = vld [vmem:[#allocation3 + $0x18] sm:$0xff]
          %v496 = vld [vmem:[#allocation3 + $0x20] sm:$0xff]
          %v497 = vld [vmem:[#allocation3 + $0x28] sm:$0xff]
          %v498 = vld [vmem:[#allocation3 + $0x30] sm:$0xff]
          %v499 = vld [vmem:[#allocation3 + $0x38] sm:$0xff]
          %v500 = vld [vmem:[#allocation3 + $0x40] sm:$0xff]
          %v501 = vld [vmem:[#allocation3 + $0x48] sm:$0xff]
          %v502 = vld [vmem:[#allocation3 + $0x50] sm:$0xff]
          %v503 = vld [vmem:[#allocation3 + $0x58] sm:$0xff]
          %v504 = vld [vmem:[#allocation3 + $0x60] sm:$0xff]
          %v505 = vld [vmem:[#allocation3 + $0x68] sm:$0xff]
          %v506 = vld [vmem:[#allocation3 + $0x70] sm:$0xff]
          %v507 = vld [vmem:[#allocation3 + $0x78] sm:$0xff]
          %v508 = vld [vmem:[%s6] sm:$0x1]
          %509 = vmatprep.subr.mxu0 0.0
          %510 = vmatpush1.msra.mxu0 %v492
          %511 = vmatprep.subr.mxu0 0.0
          %512 = vmatpush1.msra.mxu0 %v493
          %513 = vmatprep.subr.mxu0 0.0
          %514 = vmatpush1.msra.mxu0 %v494
          %515 = vmatprep.subr.mxu0 0.0
          %516 = vmatpush1.msra.mxu0 %v495
          %517 = vmatprep.subr.mxu0 0.0
          %518 = vmatpush1.msra.mxu0 %v496
          %519 = vmatprep.subr.mxu0 0.0
          %520 = vmatpush1.msra.mxu0 %v497
          %521 = vmatprep.subr.mxu0 0.0
          %522 = vmatpush1.msra.mxu0 %v498
          %523 = vmatprep.subr.mxu0 0.0
          %524 = vmatpush1.msra.mxu0 %v499
          %525 = vmatprep.subr.mxu0 0.0
          %526 = vmatpush1.msra.mxu0 %v500
          %527 = vmatprep.subr.mxu0 0.0
          %528 = vmatpush1.msra.mxu0 %v501
          %529 = vmatprep.subr.mxu0 0.0
          %530 = vmatpush1.msra.mxu0 %v502
          %531 = vmatprep.subr.mxu0 0.0
          %532 = vmatpush1.msra.mxu0 %v503
          %533 = vmatprep.subr.mxu0 0.0
          %534 = vmatpush1.msra.mxu0 %v504
          %535 = vmatprep.subr.mxu0 0.0
          %536 = vmatpush1.msra.mxu0 %v505
          %537 = vmatprep.subr.mxu0 0.0
          %538 = vmatpush1.msra.mxu0 %v506
          %539 = vmatprep.subr.mxu0 0.0
          %540 = vmatpush1.msra.mxu0 %v507
          %541 = vmatprep.subr.mxu0 0.0
          %542 = vmatpush1.msra.mxu0 0.0
          %543 = vmatprep.subr.mxu0 0.0
          %544 = vmatpush1.msra.mxu0 0.0
          %545 = vmatprep.subr.mxu0 0.0
          %546 = vmatpush1.msra.mxu0 0.0
          %547 = vmatprep.subr.mxu0 0.0
          %548 = vmatpush1.msra.mxu0 0.0
          %549 = vmatprep.subr.mxu0 0.0
          %550 = vmatpush1.msra.mxu0 0.0
          %551 = vmatprep.subr.mxu0 0.0
          %552 = vmatpush1.msra.mxu0 0.0
          %553 = vmatprep.subr.mxu0 0.0
          %554 = vmatpush1.msra.mxu0 0.0
          %555 = vmatprep.subr.mxu0 0.0
          %556 = vmatpush1.msra.mxu0 0.0
          %557 = vmatprep.subr.mxu0 0.0
          %558 = vmatpush1.msra.mxu0 0.0
          %559 = vmatprep.subr.mxu0 0.0
          %560 = vmatpush1.msra.mxu0 0.0
          %561 = vmatprep.subr.mxu0 0.0
          %562 = vmatpush1.msra.mxu0 0.0
          %563 = vmatprep.subr.mxu0 0.0
          %564 = vmatpush1.msra.mxu0 0.0
          %565 = vmatprep.subr.mxu0 0.0
          %566 = vmatpush1.msra.mxu0 0.0
          %567 = vmatprep.subr.mxu0 0.0
          %568 = vmatpush1.msra.mxu0 0.0
          %569 = vmatprep.subr.mxu0 0.0
          %570 = vmatpush1.msra.mxu0 0.0
          %571 = vmatprep.subr.mxu0 0.0
          %572 = vmatpush1.msra.mxu0 0.0
          %573 = vmatprep.mubr.f32.mxu0 0.0
          %574 = vmatmul.mubr.f32.gmra.mrb[0].mxu0 %v491
          %v575 = vpop.f32.mrb[0].mxu0
          %v576 = vadd.f32 %v508, %v575
          %v577 = vpop.f32.mrb[0].mxu0
          %578 = vdwg.mxu0
          %579 = vst [vmem:[%s305] sm:$0x1] %v576
        $region60: #{tpu_custom_call.1} parent=47 // pred_fallthru
          _
        %s580 = sand.u32 %s196, 1
        %s581 = scalar_lea.sflag [#allocation5], %s580
        %s582 = sand.u32 %s196, 1
        %s583 = scalar_lea.vmem [#allocation6], %s582
        // Predicated region
        $region61: #{tpu_custom_call.1} parent=47 // pred_check
          %p584 = pneg %p206
        $region62: #{tpu_custom_call.1} parent=47 // pred_check_branch
          %586 = sbr.rel (%p584) target = $region64
        $region63: #{tpu_custom_call.1} parent=47 // pred_region
          %s588 = ssub.s32 16, 16
          %589 = vsyncadd %s581, %s588
          %s590 = smul.addr %s26, 16
          %s591 = scalar_lea.hbm %s7, %s590
          %s593 = sshll.u32 %s583, 4
          %s594 = int_to_ptr.vmem [resolvable:$true] %s593
          %596 = dma.vmem_to_hbm [thread:$0]  %s594, 16, %s591, %s581
        $region64: #{tpu_custom_call.1} parent=47 // pred_fallthru
          _
      $region48: #{tpu_custom_call.1} parent=5 // pred_fallthru
        _
      %p597 = scmp.le.s32.totalorder 2, %s17
      // Predicated region
      $region65: #{tpu_custom_call.1} parent=5 // pred_check
        %p598 = pneg %p597
      $region66: #{tpu_custom_call.1} parent=5 // pred_check_branch
        %600 = sbr.rel (%p598) target = $region68
      $region67: #{tpu_custom_call.1} parent=5 // pred_region
        %s601 = ssub.s32 %s17, 2
        // Predicated region
        $region69: #{tpu_custom_call.1} parent=67 // pred_check
          %p602 = pneg %p212
        $region70: #{tpu_custom_call.1} parent=67 // pred_check_branch
          %604 = sbr.rel (%p602) target = $region72
        $region71: #{tpu_custom_call.1} parent=67 // pred_region
          %s605 = sand.u32 %s197, 1
          %s606 = scalar_lea.sflag [#allocation5], %s605
          %s607 = sand.u32 %s197, 1
          %s608 = scalar_lea.vmem [#allocation6], %s607
          %609 = dma.done %s606, 16
        $region72: #{tpu_custom_call.1} parent=67 // pred_fallthru
          _
      $region68: #{tpu_custom_call.1} parent=5 // pred_fallthru
        _
    $region6: #{tpu_custom_call.1} parent=1 // loop_footer
      %s21 = sadd.s32 1, %s17
    $region7: #{tpu_custom_call.1} parent=1 // loop_footer_branch
      %16 = sbr.rel target = $region3
    $region8: #{tpu_custom_call.1} parent=1 // loop_exit
      _
    %610 = vsyncpa [#allocation4], 1
    %s611 = scalar_lea.sflag [#allocation4], 1
    %612 = vsyncpa %s611, 1
    %613 = vsyncpa [#allocation5], 1
    %s614 = scalar_lea.sflag [#allocation5], 1
    %615 = vsyncpa %s614, 1

</llo_original>
